<compile_context>
chip_gen: v7x
topology: tpu7x:2x2x1
jax: 0.10.0
libtpu: 0.0.40
codegen_flags: <defaults>
</compile_context>

<pallas_src>
import jax
import jax.numpy as jnp
from jax.experimental import pallas as pl
from jax.experimental.pallas import tpu as pltpu

latent_dim = 10


def _round_up(v, m):
    return (v + m - 1) // m * m


def classifier_kernel(xT_ref, w_ref, b_ref, o_ref):
    # xT_ref: (D, TB) f32 VMEM   (features on sublanes, batch on lanes)
    # w_ref : (D, 1)  f32 VMEM   (grid-resident, broadcasts across lanes)
    # b_ref : (1,)    f32 SMEM   (scalar bias)
    # o_ref : (1, TB) f32 VMEM   (lane-dense output row)
    xT = xT_ref[...]
    w = w_ref[...]
    b = b_ref[0]  # scalar read from SMEM
    # VPU multiply + short sublane reduce over D; no MXU, no cross-lane XLU
    # reduce, and an unmasked lane-dense store.
    o_ref[...] = jnp.sum(xT * w, axis=0, keepdims=True) + b


def classifier_forward(x, w, b, *, tb=65536):
    """Linear(latent_dim -> 1): x (B, D) f32, w (1, D), b (1,) -> (B, 1) f32."""
    B, D = x.shape
    x32 = x.astype(jnp.float32)
    w_col = jnp.transpose(w.reshape(1, D).astype(jnp.float32))  # (D, 1)
    b1 = b.reshape(1).astype(jnp.float32)

    if B <= 128:
        # Single grid step with full-extent blocks: no padding, no ragged edges.
        TB, B_pad = B, B
    else:
        TB = min(_round_up(B, 128), max(128, (tb // 128) * 128))
        B_pad = _round_up(B, TB)

    # Put the batch on the lane axis.  The transpose (and tail pad, when one is
    # needed) is a single fused XLA copy of x; padded columns evaluate to `b`
    # but are sliced off below, so they never affect the result.
    xT = jnp.transpose(x32)  # (D, B)
    if B_pad != B:
        xT = jnp.pad(xT, ((0, 0), (0, B_pad - B)))

    # VMEM budget for the chosen tile (double-buffered x, out, w) + headroom.
    x_tile = _round_up(D, 8) * _round_up(TB, 128) * 4
    o_tile = 8 * _round_up(TB, 128) * 4
    w_tile = _round_up(D, 8) * 128 * 4
    vmem_bytes = max(2 * (x_tile + o_tile + w_tile) + (1 << 20), 4 << 20)

    out = pl.pallas_call(
        classifier_kernel,
        out_shape=jax.ShapeDtypeStruct((1, B_pad), jnp.float32),
        grid=(B_pad // TB,),
        in_specs=[
            pl.BlockSpec((D, TB), lambda i: (0, i)),            # x^T tiled over lanes
            pl.BlockSpec((D, 1), lambda i: (0, 0)),             # w resident across grid
            pl.BlockSpec(memory_space=pltpu.MemorySpace.SMEM),  # bias scalar in SMEM
        ],
        out_specs=pl.BlockSpec((1, TB), lambda i: (0, i)),      # lane-dense output row
        compiler_params=pltpu.CompilerParams(
            dimension_semantics=("parallel",),                  # shard batch across TCs (v7x)
            vmem_limit_bytes=vmem_bytes,
        ),
    )(xT, w_col, b1)
    return out[0, :B].reshape(B, 1)


if __name__ == "__main__":
    key = jax.random.PRNGKey(0)
    k_x, k_w, k_b, k_conv, k_x2 = jax.random.split(key, 5)

    batch = 2
    x = jax.random.normal(k_x, (batch, latent_dim), dtype=jnp.float32)

    # PyTorch-style uniform(-1/sqrt(fan_in), 1/sqrt(fan_in)) init for nn.Linear(10, 1).
    bound = 1.0 / jnp.sqrt(jnp.float32(latent_dim))
    w = jax.random.uniform(k_w, (1, latent_dim), jnp.float32, -bound, bound)
    b = jax.random.uniform(k_b, (1,), jnp.float32, -bound, bound)

    # Parameter created in __init__ but unused in forward() (Conv1d(1, 1, 2, bias=False)).
    conv_w = jax.random.uniform(k_conv, (1, 1, 2), jnp.float32, -jnp.sqrt(0.5), jnp.sqrt(0.5))  # unused

    # Small-shape check (matches the module's actual usage: B=2).
    out = jax.block_until_ready(classifier_forward(x, w, b))
    ref = (x @ w.T + b).astype(jnp.float32)
    assert out.shape == (batch, 1) and out.dtype == jnp.float32
    assert jnp.allclose(out, ref, atol=1e-5, rtol=1e-5)

    # Gridded / padded path: non-multiple-of-128 batch with multiple grid steps.
    x2 = jax.random.normal(k_x2, (300, latent_dim), dtype=jnp.float32)
    out2 = jax.block_until_ready(classifier_forward(x2, w, b, tb=128))
    ref2 = (x2 @ w.T + b).astype(jnp.float32)
    assert out2.shape == (300, 1) and out2.dtype == jnp.float32
    assert jnp.allclose(out2, ref2, atol=1e-5, rtol=1e-5)

    print("KERNEL_OK")
</pallas_src>

<mosaic_0001>
module attributes {stable_mosaic.version = 11 : i64} {
  func.func @classifier_kernel(%arg0: i32, %arg1: memref<10x2xf32, #tpu.memory_space<vmem>>, %arg2: memref<10x1xf32, #tpu.memory_space<vmem>>, %arg3: memref<1xf32, #tpu.memory_space<smem>>, %arg4: memref<1x2xf32, #tpu.memory_space<vmem>>) attributes {dimension_semantics = [#tpu.dimension_semantics<parallel>], iteration_bounds = array<i64: 1>, scalar_prefetch = 0 : i64, scratch_operands = 0 : i64, tpu.core_type = #tpu.core_type<tc>, window_params = [{transform_indices = @transform_0, window_bounds = array<i64: 10, 2>}, {pipeline_mode = #tpu.pipeline_mode<synchronous>, transform_indices = @transform_1, window_bounds = array<i64: 10, 1>}, {transform_indices = @transform_2, window_bounds = array<i64: 1>}, {transform_indices = @transform_3, window_bounds = array<i64: 1, 2>}]} {
    %c0 = arith.constant 0 : index
    %c0_0 = arith.constant 0 : index
    %0 = vector.load %arg1[%c0, %c0_0] : memref<10x2xf32, #tpu.memory_space<vmem>>, vector<10x2xf32>
    %c0_1 = arith.constant 0 : index
    %c0_2 = arith.constant 0 : index
    %1 = vector.load %arg2[%c0_1, %c0_2] : memref<10x1xf32, #tpu.memory_space<vmem>>, vector<10x1xf32>
    %c0_3 = arith.constant 0 : index
    %2 = memref.load %arg3[%c0_3] : memref<1xf32, #tpu.memory_space<smem>>
    %3 = vector.broadcast %1 : vector<10x1xf32> to vector<10x2xf32>
    %4 = arith.mulf %0, %3 : vector<10x2xf32>
    %cst = arith.constant dense<0.000000e+00> : vector<2xf32>
    %5 = vector.multi_reduction <add>, %4, %cst [0] : vector<10x2xf32> to vector<2xf32>
    %6 = vector.shape_cast %5 : vector<2xf32> to vector<1x2xf32>
    %7 = vector.broadcast %2 : f32 to vector<1x2xf32>
    %8 = arith.addf %6, %7 : vector<1x2xf32>
    %c0_4 = arith.constant 0 : index
    %c0_5 = arith.constant 0 : index
    %9 = vector.load %arg4[%c0_4, %c0_5] : memref<1x2xf32, #tpu.memory_space<vmem>>, vector<1x2xf32>
    tpu.vector_store %arg4[%c0_4, %c0_5], %8 {strides = array<i32>} : memref<1x2xf32, #tpu.memory_space<vmem>>, vector<1x2xf32>,
    return
  }
  func.func @transform_0(%arg0: i32) -> (i32, i32) {
    %c0_i32 = arith.constant 0 : i32
    %c0_i32_0 = arith.constant 0 : i32
    return %c0_i32, %arg0 : i32, i32
  }
  func.func @transform_1(%arg0: i32) -> (i32, i32) {
    %c0_i32 = arith.constant 0 : i32
    %c0_i32_0 = arith.constant 0 : i32
    %c0_i32_1 = arith.constant 0 : i32
    return %c0_i32, %c0_i32_0 : i32, i32
  }
  func.func @transform_2(%arg0: i32) -> i32 {
    %c0_i32 = arith.constant 0 : i32
    %c0_i32_0 = arith.constant 0 : i32
    return %c0_i32 : i32
  }
  func.func @transform_3(%arg0: i32) -> (i32, i32) {
    %c0_i32 = arith.constant 0 : i32
    %c0_i32_0 = arith.constant 0 : i32
    return %c0_i32, %arg0 : i32, i32
  }
}

</mosaic_0001>

<llo_original>
// kernel: tpu_custom_call.1
$region0: #{tpu_custom_call.1}
  #allocation0 [shape = 'u32[]', space=smem, size = 0x4, offset = 0x4, fixed_abs, tag = 'smem constant byte address 0x4 - core index']
  #allocation1 [shape = 'u32[144,128]{1,0:T(1,128)}', space=vmem, size = 0x12000, scoped, tag = 'internal scratch']
  #allocation2 [shape = 'f32[1]{0:T(128)S(6)}', space=smem, size = 0x200, scoped, tag = 'scoped memory for tpu_custom_call.1']
  %s0 = inlined_call_operand.vmem [shape: f32[10,2], index: 0, kind: input, shape index: {}]
  %s1 = inlined_call_operand.vmem [shape: f32[10,1], index: 1, kind: input, shape index: {}]
  %s2 = inlined_call_operand.<no memory space> [shape: f32[1], index: 2, kind: input, shape index: {}]
  %s3 = inlined_call_operand.hbm [shape: f32[1,2], index: 3, kind: output, shape index: {}]
  %s4 = sld [smem:[#allocation0]]
  $region22: #{tpu_custom_call.1} parent=0
    _
  %s6 = ssub.s32 1, %s4
  %s7 = scalar_select 0, %s6, %s4
  %8 = sst [smem:[#allocation2]] %s2
  $region1: #{tpu_custom_call.1} parent=0
    #allocation3 [shape = 'u8[512]{0}', space=vmem, size = 0x400, scoped, tag = 'output window, operand 0, single buffered']
    #allocation4 [shape = 's32[1]{0}', space=sflag, size = 0x4, scoped, tag = 'scoped memory for tpu_custom_call.1']
    %9 = vsyncpa [#allocation4], 0
    // Predicated region
    $region2: #{tpu_custom_call.1} parent=1 // pred_check
      _
    $region3: #{tpu_custom_call.1} parent=1 // pred_check_branch
      %11 = sbr.rel (0) target = $region5
    $region4: #{tpu_custom_call.1} parent=1 // pred_region
      _
    $region5: #{tpu_custom_call.1} parent=1 // pred_fallthru
      _
    // Predicated region
    $region6: #{tpu_custom_call.1} parent=1 // pred_check
      _
    $region7: #{tpu_custom_call.1} parent=1 // pred_check_branch
      %13 = sbr.rel (0) target = $region9
    $region8: #{tpu_custom_call.1} parent=1 // pred_region
      _
    $region9: #{tpu_custom_call.1} parent=1 // pred_fallthru
      _
    // Predicated region
    $region10: #{tpu_custom_call.1} parent=1 // pred_check
      _
    $region11: #{tpu_custom_call.1} parent=1 // pred_check_branch
      %15 = sbr.rel (0) target = $region13
    $region12: #{tpu_custom_call.1} parent=1 // pred_region
      _
    $region13: #{tpu_custom_call.1} parent=1 // pred_fallthru
      _
    %v16 = vld [vmem:[%s0] sm:$0xff]
    %v17 = vld [vmem:[%s0 + $0x8] sm:$0x3]
    %v18 = vld [vmem:[%s1] sm:$0xff]
    %v19 = vld [vmem:[%s1 + $0x8] sm:$0x3]
    %s20 = sld [smem:[#allocation2]]
    %22 = vset.pattern.permute.xlu0 0
    %23 = vperm.xlu0 %22, %v18
    %v24 = vpop.permute.xlu0 %23
    %27 = vset.pattern.permute.xlu0 0
    %28 = vperm.xlu0 %27, %v19
    %v29 = vpop.permute.xlu0 %28
    %v31 = vmul.f32 %v16, %v24
    %v32 = vmul.f32 %v17, %v29
    %vm33 = vcmask 15360
    %v34 = vsel %vm33, %v31, 0.0
    %vm35 = vcmask 9216
    %v36 = vsel %vm35, %v32, 0.0
    %v37 = vadd.f32 %v34, %v36
    %v38 = vrot.slane %v37, 4
    %v39 = vadd.f32 %v37, %v38
    %v40 = vrot.slane %v39, 2
    %v41 = vadd.f32 %v39, %v40
    %v42 = vrot.slane %v41, 1
    %v43 = vadd.f32 %v41, %v42
    %v44 = vstv %s20
    %v45 = vadd.f32 %v43, %v44
    %vm46 = vcmask 8192
    %47 = vst.msk [vmem:[#allocation3] sm:$0x1] %vm46, %v45
    // Predicated region
    $region14: #{tpu_custom_call.1} parent=1 // pred_check
      _
    $region15: #{tpu_custom_call.1} parent=1 // pred_check_branch
      %49 = sbr.rel (0) target = $region17
    $region16: #{tpu_custom_call.1} parent=1 // pred_region
      %s51 = ssub.s32 16, 16
      %52 = vsyncadd [#allocation4], %s51
      %s54 = sshll.u32 [#allocation3], 4
      %s55 = int_to_ptr.vmem [resolvable:$true] %s54
      %57 = dma.vmem_to_hbm [thread:$0]  %s55, 16, %s3, [#allocation4]
    $region17: #{tpu_custom_call.1} parent=1 // pred_fallthru
      _
    // Predicated region
    $region18: #{tpu_custom_call.1} parent=1 // pred_check
      _
    $region19: #{tpu_custom_call.1} parent=1 // pred_check_branch
      %59 = sbr.rel (0) target = $region21
    $region20: #{tpu_custom_call.1} parent=1 // pred_region
      %60 = dma.done [#allocation4], 16
    $region21: #{tpu_custom_call.1} parent=1 // pred_fallthru
      _
    %61 = vsyncpa [#allocation4], 1

</llo_original>
